<compile_context>
chip_gen: v7x
topology: tpu7x:2x2x1
jax: 0.10.0
libtpu: 0.0.40
codegen_flags: <defaults>
</compile_context>

<pallas_src>
import functools

import jax
import jax.numpy as jnp
from jax.experimental import pallas as pl
from jax.experimental.pallas import tpu as pltpu


# ----------------------------------------------------------------------------
# Kernel
# ----------------------------------------------------------------------------
def _fused_ensemble_kernel(x_ref, w1_ref, b1_ref, w2_ref, b2_ref, w3_ref, b3_ref,
                           out_ref):
    # x_ref : (TB, D_in)        bf16
    # w1_ref: (D_in, n_Q*H1)    bf16   b1_ref: (1, n_Q*H1) f32
    # w2_ref: (n_Q*H1, n_Q*H2)  bf16   b2_ref: (1, n_Q*H2) f32  (block-diagonal)
    # w3_ref: (n_Q*H2, n_Q)     bf16   b3_ref: (1, n_Q)    f32
    # out_ref: (TB, n_Q)        f32
    x = x_ref[...]

    h1 = jnp.dot(x, w1_ref[...], preferred_element_type=jnp.float32)
    h1 = jnp.maximum(h1 + b1_ref[...], 0.0)            # f32 epilogue
    h1 = h1.astype(w2_ref.dtype)                        # bf16 MXU operand

    h2 = jnp.dot(h1, w2_ref[...], preferred_element_type=jnp.float32)
    h2 = jnp.maximum(h2 + b2_ref[...], 0.0)
    h2 = h2.astype(w3_ref.dtype)

    q = jnp.dot(h2, w3_ref[...], preferred_element_type=jnp.float32)
    out_ref[...] = (q + b3_ref[...]).astype(out_ref.dtype)


# ----------------------------------------------------------------------------
# Parameter packing
# ----------------------------------------------------------------------------
def pack_params(params, *, matmul_dtype=jnp.bfloat16):
    """Pack per-critic weights into one lane-packed / block-diagonal set.

    Weights are cast to `matmul_dtype` (bf16 for the MXU); biases stay f32
    since the bias+ReLU epilogue runs in f32.
    """
    (w1, b1), (w2, b2), (w3, b3) = params          # (n_Q, in, out), (n_Q, 1, out)
    n_Q, d_in, h1 = w1.shape
    h2 = w2.shape[-1]

    # Layer 1: concat critics along output lanes.
    W1p = jnp.concatenate([w1[q] for q in range(n_Q)], axis=1)          # (D_in, n_Q*H1)
    b1p = jnp.concatenate([b1[q] for q in range(n_Q)], axis=1)          # (1, n_Q*H1)

    # Layer 2: block-diagonal so critics stay independent.
    W2p = jnp.zeros((n_Q * h1, n_Q * h2), jnp.float32)
    for q in range(n_Q):
        W2p = W2p.at[q * h1:(q + 1) * h1, q * h2:(q + 1) * h2].set(w2[q])
    b2p = jnp.concatenate([b2[q] for q in range(n_Q)], axis=1)          # (1, n_Q*H2)

    # Layer 3: each critic's head writes its own output column.
    W3p = jnp.zeros((n_Q * h2, n_Q), jnp.float32)
    for q in range(n_Q):
        W3p = W3p.at[q * h2:(q + 1) * h2, q:q + 1].set(w3[q])
    b3p = jnp.concatenate([b3[q] for q in range(n_Q)], axis=1).reshape(1, n_Q)

    return (W1p.astype(matmul_dtype), b1p.astype(jnp.float32),
            W2p.astype(matmul_dtype), b2p.astype(jnp.float32),
            W3p.astype(matmul_dtype), b3p.astype(jnp.float32))


# ----------------------------------------------------------------------------
# Batch tiling
# ----------------------------------------------------------------------------
def _round_up(v, m):
    return -(-v // m) * m


def _choose_batch_tiling(batch, block_b):
    """Pick (tile_b, padded_b): sublane-aligned, >=2 steps when splittable,
    and <8 rows of padding waste per tile for awkward batch sizes."""
    assert block_b % 8 == 0, "block_b must be a multiple of 8 (sublane)"
    b8 = _round_up(max(batch, 1), 8)
    if b8 <= block_b:
        if b8 >= 16:
            # Split into (at least) two tiles so the "parallel" grid axis can
            # shard across v7x's 2 TensorCores.
            tb = _round_up(-(-b8 // 2), 8)
        else:
            tb = b8
    else:
        # Adaptive tile size: cdiv-even split bounds pad waste to <8 rows/tile.
        n_tiles = -(-b8 // block_b)
        tb = _round_up(-(-b8 // n_tiles), 8)
    b_pad = _round_up(b8, tb)
    return tb, b_pad


# ----------------------------------------------------------------------------
# Forward wrapper
# ----------------------------------------------------------------------------
@functools.partial(jax.jit, static_argnames=("block_b",))
def ensemble_critic_forward(state, action, goal, packed_params, *, block_b=4096):
    """Pallas forward for EnsembleCritic. Returns (B, n_Q) == torch.cat(Q, -1)."""
    W1p, b1p, W2p, b2p, W3p, b3p = packed_params
    matmul_dtype = W1p.dtype

    # Fold the bf16 cast into the concat (half the materialized pre-kernel buffer).
    x = jnp.concatenate([state, action, goal], axis=-1).astype(matmul_dtype)
    B, d_in = x.shape
    h1p = W1p.shape[1]
    h2p = W2p.shape[1]
    n_Q = W3p.shape[1]

    tb, b_pad = _choose_batch_tiling(B, block_b)
    if b_pad != B:
        # Padded rows produce garbage (ReLU(bias)-driven) values; they are
        # sliced off below.  Any future in-kernel batch reduction must mask.
        x = jnp.pad(x, ((0, b_pad - B), (0, 0)))

    out = pl.pallas_call(
        _fused_ensemble_kernel,
        out_shape=jax.ShapeDtypeStruct((b_pad, n_Q), jnp.float32),
        grid_spec=pltpu.PrefetchScalarGridSpec(
            num_scalar_prefetch=0,
            grid=(b_pad // tb,),
            in_specs=[
                pl.BlockSpec((tb, d_in), lambda i: (i, 0)),    # x  (batch-tiled)
                pl.BlockSpec((d_in, h1p), lambda i: (0, 0)),   # W1 (VMEM-resident)
                pl.BlockSpec((1, h1p), lambda i: (0, 0)),      # b1
                pl.BlockSpec((h1p, h2p), lambda i: (0, 0)),    # W2 (block-diagonal)
                pl.BlockSpec((1, h2p), lambda i: (0, 0)),      # b2
                pl.BlockSpec((h2p, n_Q), lambda i: (0, 0)),    # W3
                pl.BlockSpec((1, n_Q), lambda i: (0, 0)),      # b3
            ],
            out_specs=pl.BlockSpec((tb, n_Q), lambda i: (i, 0)),
        ),
        compiler_params=pltpu.CompilerParams(
            dimension_semantics=("parallel",)),   # batch tiles -> v7x cores
    )(x, W1p, b1p, W2p, b2p, W3p, b3p)

    return out[:B]


# ----------------------------------------------------------------------------
# Init + pure-JAX reference
# ----------------------------------------------------------------------------
def init_params(key, state_dim, action_dim, hidden_dims, n_Q):
    """Deterministic synthetic init (uniform, PyTorch Linear-like bounds)."""
    d_in = 2 * state_dim + action_dim
    dims = [d_in] + list(hidden_dims) + [1]
    params = []
    for li in range(len(dims) - 1):
        fan_in, fan_out = dims[li], dims[li + 1]
        bound = 1.0 / jnp.sqrt(float(fan_in))
        key, kw, kb = jax.random.split(key, 3)
        w = jax.random.uniform(kw, (n_Q, fan_in, fan_out), jnp.float32, -bound, bound)
        b = jax.random.uniform(kb, (n_Q, 1, fan_out), jnp.float32, -bound, bound)
        params.append((w, b))
    return params


def ensemble_critic_ref(state, action, goal, params, *, matmul_dtype=jnp.float32):
    """Pure-JAX reference (per-critic, unpacked).

    With matmul_dtype=bf16 it mirrors the kernel's operand casting exactly
    (bf16 matmul inputs, f32 accumulate, f32 bias+ReLU epilogue).
    """
    x = jnp.concatenate([state, action, goal], axis=-1).astype(jnp.float32)
    (w1, b1), (w2, b2), (w3, b3) = params
    outs = []
    for q in range(w1.shape[0]):
        h = jnp.dot(x.astype(matmul_dtype), w1[q].astype(matmul_dtype),
                    preferred_element_type=jnp.float32)
        h = jnp.maximum(h + b1[q], 0.0)
        h = jnp.dot(h.astype(matmul_dtype), w2[q].astype(matmul_dtype),
                    preferred_element_type=jnp.float32)
        h = jnp.maximum(h + b2[q], 0.0)
        o = jnp.dot(h.astype(matmul_dtype), w3[q].astype(matmul_dtype),
                    preferred_element_type=jnp.float32)
        outs.append(o + b3[q])
    return jnp.concatenate(outs, axis=-1)


# ----------------------------------------------------------------------------
# Self-test
# ----------------------------------------------------------------------------
if __name__ == "__main__":
    state_dim, action_dim = 12, 8
    hidden_dims = [32, 32]
    n_Q = 2

    key = jax.random.PRNGKey(0)
    kp, kdata = jax.random.split(key, 2)

    params = init_params(kp, state_dim, action_dim, hidden_dims, n_Q)
    packed = pack_params(params)

    # B=8 -> single-tile grid; B=24 -> 2 "parallel" grid steps (v7x split path).
    for B in (8, 24):
        ks, ka, kg = jax.random.split(jax.random.fold_in(kdata, B), 3)
        state = jax.random.normal(ks, (B, state_dim), jnp.float32)
        action = jax.random.normal(ka, (B, action_dim), jnp.float32)
        goal = jax.random.normal(kg, (B, state_dim), jnp.float32)

        out = jax.block_until_ready(ensemble_critic_forward(state, action, goal, packed))
        assert out.shape == (B, n_Q), out.shape

        # Tight check against a reference using the same bf16 MXU operands.
        ref_bf16 = ensemble_critic_ref(state, action, goal, params,
                                       matmul_dtype=jnp.bfloat16)
        assert jnp.allclose(out, ref_bf16, atol=1e-4, rtol=1e-4), (out, ref_bf16)

        # Looser sanity check against the pure-f32 (PyTorch-semantics) reference.
        ref_f32 = ensemble_critic_ref(state, action, goal, params)
        assert jnp.allclose(out, ref_f32, atol=5e-2, rtol=5e-2), (out, ref_f32)

    print("KERNEL_OK")
</pallas_src>

<mosaic_0001>
module attributes {stable_mosaic.version = 11 : i64} {
  func.func @_fused_ensemble_kernel(%arg0: i32, %arg1: memref<8x32xbf16, #tpu.memory_space<vmem>>, %arg2: memref<32x64xbf16, #tpu.memory_space<vmem>>, %arg3: memref<1x64xf32, #tpu.memory_space<vmem>>, %arg4: memref<64x64xbf16, #tpu.memory_space<vmem>>, %arg5: memref<1x64xf32, #tpu.memory_space<vmem>>, %arg6: memref<64x2xbf16, #tpu.memory_space<vmem>>, %arg7: memref<1x2xf32, #tpu.memory_space<vmem>>, %arg8: memref<8x2xf32, #tpu.memory_space<vmem>>) attributes {dimension_semantics = [#tpu.dimension_semantics<parallel>], iteration_bounds = array<i64: 1>, scalar_prefetch = 0 : i64, scratch_operands = 0 : i64, tpu.core_type = #tpu.core_type<tc>, window_params = [{transform_indices = @transform_0, window_bounds = array<i64: 8, 32>}, {pipeline_mode = #tpu.pipeline_mode<synchronous>, transform_indices = @transform_1, window_bounds = array<i64: 32, 64>}, {pipeline_mode = #tpu.pipeline_mode<synchronous>, transform_indices = @transform_2, window_bounds = array<i64: 1, 64>}, {pipeline_mode = #tpu.pipeline_mode<synchronous>, transform_indices = @transform_3, window_bounds = array<i64: 64, 64>}, {pipeline_mode = #tpu.pipeline_mode<synchronous>, transform_indices = @transform_4, window_bounds = array<i64: 1, 64>}, {pipeline_mode = #tpu.pipeline_mode<synchronous>, transform_indices = @transform_5, window_bounds = array<i64: 64, 2>}, {pipeline_mode = #tpu.pipeline_mode<synchronous>, transform_indices = @transform_6, window_bounds = array<i64: 1, 2>}, {transform_indices = @transform_7, window_bounds = array<i64: 8, 2>}]} {
    %c0 = arith.constant 0 : index
    %c0_0 = arith.constant 0 : index
    %0 = vector.load %arg1[%c0, %c0_0] : memref<8x32xbf16, #tpu.memory_space<vmem>>, vector<8x32xbf16>
    %c0_1 = arith.constant 0 : index
    %c0_2 = arith.constant 0 : index
    %1 = vector.load %arg2[%c0_1, %c0_2] : memref<32x64xbf16, #tpu.memory_space<vmem>>, vector<32x64xbf16>
    %cst = arith.constant dense<0.000000e+00> : vector<8x64xf32>
    %2 = tpu.matmul %0, %1, %cst {dimension_numbers = #tpu.dot_dimension_numbers<[1], [0], [0], [1], [0, 0, 1, 1], [], []>} : vector<8x32xbf16>, vector<32x64xbf16>, vector<8x64xf32> -> vector<8x64xf32>
    %c0_3 = arith.constant 0 : index
    %c0_4 = arith.constant 0 : index
    %3 = vector.load %arg3[%c0_3, %c0_4] : memref<1x64xf32, #tpu.memory_space<vmem>>, vector<1x64xf32>
    %4 = vector.broadcast %3 : vector<1x64xf32> to vector<8x64xf32>
    %5 = arith.addf %2, %4 : vector<8x64xf32>
    %cst_5 = arith.constant 0.000000e+00 : f32
    %6 = vector.broadcast %cst_5 : f32 to vector<8x64xf32>
    %7 = arith.maximumf %5, %6 : vector<8x64xf32>
    %8 = arith.truncf %7 : vector<8x64xf32> to vector<8x64xbf16>
    %c0_6 = arith.constant 0 : index
    %c0_7 = arith.constant 0 : index
    %9 = vector.load %arg4[%c0_6, %c0_7] : memref<64x64xbf16, #tpu.memory_space<vmem>>, vector<64x64xbf16>
    %cst_8 = arith.constant dense<0.000000e+00> : vector<8x64xf32>
    %10 = tpu.matmul %8, %9, %cst_8 {dimension_numbers = #tpu.dot_dimension_numbers<[1], [0], [0], [1], [0, 0, 1, 1], [], []>} : vector<8x64xbf16>, vector<64x64xbf16>, vector<8x64xf32> -> vector<8x64xf32>
    %c0_9 = arith.constant 0 : index
    %c0_10 = arith.constant 0 : index
    %11 = vector.load %arg5[%c0_9, %c0_10] : memref<1x64xf32, #tpu.memory_space<vmem>>, vector<1x64xf32>
    %12 = vector.broadcast %11 : vector<1x64xf32> to vector<8x64xf32>
    %13 = arith.addf %10, %12 : vector<8x64xf32>
    %cst_11 = arith.constant 0.000000e+00 : f32
    %14 = vector.broadcast %cst_11 : f32 to vector<8x64xf32>
    %15 = arith.maximumf %13, %14 : vector<8x64xf32>
    %16 = arith.truncf %15 : vector<8x64xf32> to vector<8x64xbf16>
    %c0_12 = arith.constant 0 : index
    %c0_13 = arith.constant 0 : index
    %17 = vector.load %arg6[%c0_12, %c0_13] : memref<64x2xbf16, #tpu.memory_space<vmem>>, vector<64x2xbf16>
    %cst_14 = arith.constant dense<0.000000e+00> : vector<8x2xf32>
    %18 = tpu.matmul %16, %17, %cst_14 {dimension_numbers = #tpu.dot_dimension_numbers<[1], [0], [0], [1], [0, 0, 1, 1], [], []>} : vector<8x64xbf16>, vector<64x2xbf16>, vector<8x2xf32> -> vector<8x2xf32>
    %c0_15 = arith.constant 0 : index
    %c0_16 = arith.constant 0 : index
    %19 = vector.load %arg7[%c0_15, %c0_16] : memref<1x2xf32, #tpu.memory_space<vmem>>, vector<1x2xf32>
    %20 = vector.broadcast %19 : vector<1x2xf32> to vector<8x2xf32>
    %21 = arith.addf %18, %20 : vector<8x2xf32>
    %c0_17 = arith.constant 0 : index
    %c0_18 = arith.constant 0 : index
    %22 = vector.load %arg8[%c0_17, %c0_18] : memref<8x2xf32, #tpu.memory_space<vmem>>, vector<8x2xf32>
    tpu.vector_store %arg8[%c0_17, %c0_18], %21 {strides = array<i32>} : memref<8x2xf32, #tpu.memory_space<vmem>>, vector<8x2xf32>,
    return
  }
  func.func @transform_0(%arg0: i32) -> (i32, i32) {
    %c0_i32 = arith.constant 0 : i32
    %c0_i32_0 = arith.constant 0 : i32
    return %arg0, %c0_i32 : i32, i32
  }
  func.func @transform_1(%arg0: i32) -> (i32, i32) {
    %c0_i32 = arith.constant 0 : i32
    %c0_i32_0 = arith.constant 0 : i32
    %c0_i32_1 = arith.constant 0 : i32
    return %c0_i32, %c0_i32_0 : i32, i32
  }
  func.func @transform_2(%arg0: i32) -> (i32, i32) {
    %c0_i32 = arith.constant 0 : i32
    %c0_i32_0 = arith.constant 0 : i32
    %c0_i32_1 = arith.constant 0 : i32
    return %c0_i32, %c0_i32_0 : i32, i32
  }
  func.func @transform_3(%arg0: i32) -> (i32, i32) {
    %c0_i32 = arith.constant 0 : i32
    %c0_i32_0 = arith.constant 0 : i32
    %c0_i32_1 = arith.constant 0 : i32
    return %c0_i32, %c0_i32_0 : i32, i32
  }
  func.func @transform_4(%arg0: i32) -> (i32, i32) {
    %c0_i32 = arith.constant 0 : i32
    %c0_i32_0 = arith.constant 0 : i32
    %c0_i32_1 = arith.constant 0 : i32
    return %c0_i32, %c0_i32_0 : i32, i32
  }
  func.func @transform_5(%arg0: i32) -> (i32, i32) {
    %c0_i32 = arith.constant 0 : i32
    %c0_i32_0 = arith.constant 0 : i32
    %c0_i32_1 = arith.constant 0 : i32
    return %c0_i32, %c0_i32_0 : i32, i32
  }
  func.func @transform_6(%arg0: i32) -> (i32, i32) {
    %c0_i32 = arith.constant 0 : i32
    %c0_i32_0 = arith.constant 0 : i32
    %c0_i32_1 = arith.constant 0 : i32
    return %c0_i32, %c0_i32_0 : i32, i32
  }
  func.func @transform_7(%arg0: i32) -> (i32, i32) {
    %c0_i32 = arith.constant 0 : i32
    %c0_i32_0 = arith.constant 0 : i32
    return %arg0, %c0_i32 : i32, i32
  }
}

</mosaic_0001>

<llo_original>
// kernel: ensemble_critic_forward.1
$region0: #{ensemble_critic_forward.1}
  #allocation0 [shape = 'u32[]', space=smem, size = 0x4, offset = 0x4, fixed_abs, tag = 'smem constant byte address 0x4 - core index']
  #allocation1 [shape = 'u32[144,128]{1,0:T(1,128)}', space=vmem, size = 0x12000, scoped, tag = 'internal scratch']
  %s0 = inlined_call_operand.vmem [shape: bf16[8,32], index: 0, kind: input, shape index: {}]
  %s1 = inlined_call_operand.vmem [shape: bf16[32,64], index: 1, kind: input, shape index: {}]
  %s2 = inlined_call_operand.vmem [shape: f32[1,64], index: 2, kind: input, shape index: {}]
  %s3 = inlined_call_operand.vmem [shape: bf16[64,64], index: 3, kind: input, shape index: {}]
  %s4 = inlined_call_operand.vmem [shape: f32[1,64], index: 4, kind: input, shape index: {}]
  %s5 = inlined_call_operand.vmem [shape: bf16[64,2], index: 5, kind: input, shape index: {}]
  %s6 = inlined_call_operand.vmem [shape: f32[1,2], index: 6, kind: input, shape index: {}]
  %s7 = inlined_call_operand.vmem [shape: f32[8,2], index: 7, kind: output, shape index: {}]
  %s8 = sld [smem:[#allocation0]]
  $region38: #{ensemble_critic_forward.1} parent=0
    _
  %s10 = ssub.s32 1, %s8
  %s11 = scalar_select 0, %s10, %s8
  // Predicated region
  $region2: #{ensemble_critic_forward.1} parent=0 // pred_check
    _
  $region3: #{ensemble_critic_forward.1} parent=0 // pred_check_branch
    %13 = sbr.rel (0) target = $region5
  $region4: #{ensemble_critic_forward.1} parent=0 // pred_region
    _
  $region5: #{ensemble_critic_forward.1} parent=0 // pred_fallthru
    _
  // Predicated region
  $region6: #{ensemble_critic_forward.1} parent=0 // pred_check
    _
  $region7: #{ensemble_critic_forward.1} parent=0 // pred_check_branch
    %15 = sbr.rel (0) target = $region9
  $region8: #{ensemble_critic_forward.1} parent=0 // pred_region
    _
  $region9: #{ensemble_critic_forward.1} parent=0 // pred_fallthru
    _
  // Predicated region
  $region10: #{ensemble_critic_forward.1} parent=0 // pred_check
    _
  $region11: #{ensemble_critic_forward.1} parent=0 // pred_check_branch
    %17 = sbr.rel (0) target = $region13
  $region12: #{ensemble_critic_forward.1} parent=0 // pred_region
    _
  $region13: #{ensemble_critic_forward.1} parent=0 // pred_fallthru
    _
  // Predicated region
  $region14: #{ensemble_critic_forward.1} parent=0 // pred_check
    _
  $region15: #{ensemble_critic_forward.1} parent=0 // pred_check_branch
    %19 = sbr.rel (0) target = $region17
  $region16: #{ensemble_critic_forward.1} parent=0 // pred_region
    _
  $region17: #{ensemble_critic_forward.1} parent=0 // pred_fallthru
    _
  // Predicated region
  $region18: #{ensemble_critic_forward.1} parent=0 // pred_check
    _
  $region19: #{ensemble_critic_forward.1} parent=0 // pred_check_branch
    %21 = sbr.rel (0) target = $region21
  $region20: #{ensemble_critic_forward.1} parent=0 // pred_region
    _
  $region21: #{ensemble_critic_forward.1} parent=0 // pred_fallthru
    _
  // Predicated region
  $region22: #{ensemble_critic_forward.1} parent=0 // pred_check
    _
  $region23: #{ensemble_critic_forward.1} parent=0 // pred_check_branch
    %23 = sbr.rel (0) target = $region25
  $region24: #{ensemble_critic_forward.1} parent=0 // pred_region
    _
  $region25: #{ensemble_critic_forward.1} parent=0 // pred_fallthru
    _
  // Predicated region
  $region26: #{ensemble_critic_forward.1} parent=0 // pred_check
    _
  $region27: #{ensemble_critic_forward.1} parent=0 // pred_check_branch
    %25 = sbr.rel (0) target = $region29
  $region28: #{ensemble_critic_forward.1} parent=0 // pred_region
    _
  $region29: #{ensemble_critic_forward.1} parent=0 // pred_fallthru
    _
  %v27 = vld [vmem:[%s0] sm:$0xf]
  %v28 = vld [vmem:[%s1] sm:$0xf]
  %v29 = vld [vmem:[%s1 + $0x4] sm:$0xf]
  %v30 = vld [vmem:[%s1 + $0x8] sm:$0xf]
  %v31 = vld [vmem:[%s1 + $0xc] sm:$0xf]
  %v32 = vld [vmem:[%s2] sm:$0x1]
  %v34 = vlaneseq
  %v35 = vshrl.u32 %v34, 7
  %v36 = vsub.s32 0, %v35
  %v37 = vrot.slane %v32, %v36
  %v43 = vunpack.c.l.b16 %v28
  %v44 = vunpack.c.l.b16 %v29
  %v45 = vunpack.c.l.b16 %v30
  %v46 = vunpack.c.l.b16 %v31
  %v47 = vpack.c.b16 %v44, %v43
  %v48 = vpack.c.b16 %v46, %v45
  %vm51 = vcmask 261120
  %v53 = vsel %vm51, %v27, 0
  %55 = vmatprep.subr.bf16.mxu0 0
  %56 = vmatpush1.bf16.msra.mxu0 %v47
  %57 = vmatprep.subr.bf16.mxu0 0
  %58 = vmatpush1.bf16.msra.mxu0 %v48
  %59 = vmatprep.subr.bf16.mxu0 0
  %60 = vmatpush1.bf16.msra.mxu0 0
  %61 = vmatprep.subr.bf16.mxu0 0
  %62 = vmatpush1.bf16.msra.mxu0 0
  %63 = vmatprep.subr.bf16.mxu0 0
  %64 = vmatpush1.bf16.msra.mxu0 0
  %65 = vmatprep.subr.bf16.mxu0 0
  %66 = vmatpush1.bf16.msra.mxu0 0
  %67 = vmatprep.subr.bf16.mxu0 0
  %68 = vmatpush1.bf16.msra.mxu0 0
  %69 = vmatprep.subr.bf16.mxu0 0
  %70 = vmatpush1.bf16.msra.mxu0 0
  %71 = vmatprep.subr.bf16.mxu0 0
  %72 = vmatpush1.bf16.msra.mxu0 0
  %73 = vmatprep.subr.bf16.mxu0 0
  %74 = vmatpush1.bf16.msra.mxu0 0
  %75 = vmatprep.subr.bf16.mxu0 0
  %76 = vmatpush1.bf16.msra.mxu0 0
  %77 = vmatprep.subr.bf16.mxu0 0
  %78 = vmatpush1.bf16.msra.mxu0 0
  %79 = vmatprep.subr.bf16.mxu0 0
  %80 = vmatpush1.bf16.msra.mxu0 0
  %81 = vmatprep.subr.bf16.mxu0 0
  %82 = vmatpush1.bf16.msra.mxu0 0
  %83 = vmatprep.subr.bf16.mxu0 0
  %84 = vmatpush1.bf16.msra.mxu0 0
  %85 = vmatprep.subr.bf16.mxu0 0
  %86 = vmatpush1.bf16.msra.mxu0 0
  %87 = vmatprep.mubr.bf16.mxu0 0
  %88 = vmatmul.mubr.bf16.gmra.mrb[0].mxu0 %v53
  %v89 = vpop.f32.mrb[0].mxu0
  %v90 = vadd.f32 %v37, %v89
  %v91 = vpop.f32.mrb[0].mxu0
  %v92 = vpop.f32.mrb[0].mxu0
  %v93 = vpop.f32.mrb[0].mxu0
  %94 = vdwg.mxu0
  %v95 = vmax.f32 %v90, 0.0
  %v96 = vpack.c.bf16 %v95, %v95
  %v97 = vld [vmem:[%s3] sm:$0xf]
  %v98 = vld [vmem:[%s3 + $0x4] sm:$0xf]
  %v99 = vld [vmem:[%s3 + $0x8] sm:$0xf]
  %v100 = vld [vmem:[%s3 + $0xc] sm:$0xf]
  %v101 = vld [vmem:[%s3 + $0x10] sm:$0xf]
  %v102 = vld [vmem:[%s3 + $0x14] sm:$0xf]
  %v103 = vld [vmem:[%s3 + $0x18] sm:$0xf]
  %v104 = vld [vmem:[%s3 + $0x1c] sm:$0xf]
  %v105 = vld [vmem:[%s4] sm:$0x1]
  %v107 = vlaneseq
  %v108 = vshrl.u32 %v107, 7
  %v109 = vsub.s32 0, %v108
  %v110 = vrot.slane %v105, %v109
  %v120 = vunpack.c.l.b16 %v97
  %v121 = vunpack.c.l.b16 %v98
  %v122 = vunpack.c.l.b16 %v99
  %v123 = vunpack.c.l.b16 %v100
  %v124 = vunpack.c.l.b16 %v101
  %v125 = vunpack.c.l.b16 %v102
  %v126 = vunpack.c.l.b16 %v103
  %v127 = vunpack.c.l.b16 %v104
  %v128 = vpack.c.b16 %v121, %v120
  %v129 = vpack.c.b16 %v123, %v122
  %v130 = vpack.c.b16 %v125, %v124
  %v131 = vpack.c.b16 %v127, %v126
  %vm136 = vcmask 523264
  %v138 = vsel %vm136, %v96, 0
  %140 = vmatprep.subr.bf16.mxu0 0
  %141 = vmatpush1.bf16.msra.mxu0 %v128
  %142 = vmatprep.subr.bf16.mxu0 0
  %143 = vmatpush1.bf16.msra.mxu0 %v129
  %144 = vmatprep.subr.bf16.mxu0 0
  %145 = vmatpush1.bf16.msra.mxu0 %v130
  %146 = vmatprep.subr.bf16.mxu0 0
  %147 = vmatpush1.bf16.msra.mxu0 %v131
  %148 = vmatprep.subr.bf16.mxu0 0
  %149 = vmatpush1.bf16.msra.mxu0 0
  %150 = vmatprep.subr.bf16.mxu0 0
  %151 = vmatpush1.bf16.msra.mxu0 0
  %152 = vmatprep.subr.bf16.mxu0 0
  %153 = vmatpush1.bf16.msra.mxu0 0
  %154 = vmatprep.subr.bf16.mxu0 0
  %155 = vmatpush1.bf16.msra.mxu0 0
  %156 = vmatprep.subr.bf16.mxu0 0
  %157 = vmatpush1.bf16.msra.mxu0 0
  %158 = vmatprep.subr.bf16.mxu0 0
  %159 = vmatpush1.bf16.msra.mxu0 0
  %160 = vmatprep.subr.bf16.mxu0 0
  %161 = vmatpush1.bf16.msra.mxu0 0
  %162 = vmatprep.subr.bf16.mxu0 0
  %163 = vmatpush1.bf16.msra.mxu0 0
  %164 = vmatprep.subr.bf16.mxu0 0
  %165 = vmatpush1.bf16.msra.mxu0 0
  %166 = vmatprep.subr.bf16.mxu0 0
  %167 = vmatpush1.bf16.msra.mxu0 0
  %168 = vmatprep.subr.bf16.mxu0 0
  %169 = vmatpush1.bf16.msra.mxu0 0
  %170 = vmatprep.subr.bf16.mxu0 0
  %171 = vmatpush1.bf16.msra.mxu0 0
  %172 = vmatprep.mubr.bf16.mxu0 0
  %173 = vmatmul.mubr.bf16.gmra.mrb[0].mxu0 %v138
  %v174 = vpop.f32.mrb[0].mxu0
  %v175 = vadd.f32 %v110, %v174
  %v176 = vpop.f32.mrb[0].mxu0
  %v177 = vpop.f32.mrb[0].mxu0
  %v178 = vpop.f32.mrb[0].mxu0
  %179 = vdwg.mxu0
  %v180 = vmax.f32 %v175, 0.0
  %v181 = vpack.c.bf16 %v180, %v180
  %v182 = vld [vmem:[%s5] sm:$0xf]
  %v183 = vld [vmem:[%s5 + $0x4] sm:$0xf]
  %v184 = vld [vmem:[%s5 + $0x8] sm:$0xf]
  %v185 = vld [vmem:[%s5 + $0xc] sm:$0xf]
  %v186 = vld [vmem:[%s5 + $0x10] sm:$0xf]
  %v187 = vld [vmem:[%s5 + $0x14] sm:$0xf]
  %v188 = vld [vmem:[%s5 + $0x18] sm:$0xf]
  %v189 = vld [vmem:[%s5 + $0x1c] sm:$0xf]
  %v190 = vld [vmem:[%s6] sm:$0x1]
  %v192 = vlaneseq
  %v193 = vshrl.u32 %v192, 7
  %v194 = vsub.s32 0, %v193
  %v195 = vrot.slane %v190, %v194
  %v205 = vunpack.c.l.b16 %v182
  %v206 = vunpack.c.l.b16 %v183
  %v207 = vunpack.c.l.b16 %v184
  %v208 = vunpack.c.l.b16 %v185
  %v209 = vunpack.c.l.b16 %v186
  %v210 = vunpack.c.l.b16 %v187
  %v211 = vunpack.c.l.b16 %v188
  %v212 = vunpack.c.l.b16 %v189
  %v213 = vpack.c.b16 %v206, %v205
  %v214 = vpack.c.b16 %v208, %v207
  %v215 = vpack.c.b16 %v210, %v209
  %v216 = vpack.c.b16 %v212, %v211
  %v222 = vsel %vm136, %v181, 0
  %224 = vmatprep.subr.bf16.mxu0 0
  %225 = vmatpush1.bf16.msra.mxu0 %v213
  %226 = vmatprep.subr.bf16.mxu0 0
  %227 = vmatpush1.bf16.msra.mxu0 %v214
  %228 = vmatprep.subr.bf16.mxu0 0
  %229 = vmatpush1.bf16.msra.mxu0 %v215
  %230 = vmatprep.subr.bf16.mxu0 0
  %231 = vmatpush1.bf16.msra.mxu0 %v216
  %232 = vmatprep.subr.bf16.mxu0 0
  %233 = vmatpush1.bf16.msra.mxu0 0
  %234 = vmatprep.subr.bf16.mxu0 0
  %235 = vmatpush1.bf16.msra.mxu0 0
  %236 = vmatprep.subr.bf16.mxu0 0
  %237 = vmatpush1.bf16.msra.mxu0 0
  %238 = vmatprep.subr.bf16.mxu0 0
  %239 = vmatpush1.bf16.msra.mxu0 0
  %240 = vmatprep.subr.bf16.mxu0 0
  %241 = vmatpush1.bf16.msra.mxu0 0
  %242 = vmatprep.subr.bf16.mxu0 0
  %243 = vmatpush1.bf16.msra.mxu0 0
  %244 = vmatprep.subr.bf16.mxu0 0
  %245 = vmatpush1.bf16.msra.mxu0 0
  %246 = vmatprep.subr.bf16.mxu0 0
  %247 = vmatpush1.bf16.msra.mxu0 0
  %248 = vmatprep.subr.bf16.mxu0 0
  %249 = vmatpush1.bf16.msra.mxu0 0
  %250 = vmatprep.subr.bf16.mxu0 0
  %251 = vmatpush1.bf16.msra.mxu0 0
  %252 = vmatprep.subr.bf16.mxu0 0
  %253 = vmatpush1.bf16.msra.mxu0 0
  %254 = vmatprep.subr.bf16.mxu0 0
  %255 = vmatpush1.bf16.msra.mxu0 0
  %256 = vmatprep.mubr.bf16.mxu0 0
  %257 = vmatmul.mubr.bf16.gmra.mrb[0].mxu0 %v222
  %v258 = vpop.f32.mrb[0].mxu0
  %v259 = vadd.f32 %v195, %v258
  %v260 = vpop.f32.mrb[0].mxu0
  %v261 = vpop.f32.mrb[0].mxu0
  %v262 = vpop.f32.mrb[0].mxu0
  %263 = vdwg.mxu0
  %vm264 = vcmask 15360
  %265 = vst.msk [vmem:[%s7] sm:$0xff] %vm264, %v259
  // Predicated region
  $region30: #{ensemble_critic_forward.1} parent=0 // pred_check
    _
  $region31: #{ensemble_critic_forward.1} parent=0 // pred_check_branch
    %267 = sbr.rel (0) target = $region33
  $region32: #{ensemble_critic_forward.1} parent=0 // pred_region
    _
  $region33: #{ensemble_critic_forward.1} parent=0 // pred_fallthru
    _
  // Predicated region
  $region34: #{ensemble_critic_forward.1} parent=0 // pred_check
    _
  $region35: #{ensemble_critic_forward.1} parent=0 // pred_check_branch
    %269 = sbr.rel (0) target = $region37
  $region36: #{ensemble_critic_forward.1} parent=0 // pred_region
    _
  $region37: #{ensemble_critic_forward.1} parent=0 // pred_fallthru
    _

</llo_original>
